<compile_context>
chip_gen: v6e
topology: v6e:2x2x1
jax: 0.10.0
libtpu: 0.0.40
codegen_flags: <defaults>
</compile_context>

<pallas_src>
import jax
import jax.numpy as jnp
from jax.experimental import pallas as pl
from jax.experimental.pallas import tpu as pltpu


def _round_up(a: int, b: int) -> int:
    return (a + b - 1) // b * b


def _make_pad_kernel(left: int, right: int, value, in_len: int, k: int):
    """Kernel over packed 2-D tiles: (rows, k*in_len) -> (rows, k*(in_len+left+right)).

    left/right/value/in_len/k are static Python values baked into the trace.
    The full output row is built in-register and written with one store.
    """

    def kernel(x_ref, o_ref):
        rows = o_ref.shape[0]
        dtype = o_ref.dtype
        x = x_ref[...]
        lpad = jnp.full((rows, left), value, dtype) if left > 0 else None
        rpad = jnp.full((rows, right), value, dtype) if right > 0 else None
        pieces = []
        for j in range(k):
            if lpad is not None:
                pieces.append(lpad)
            pieces.append(x[:, j * in_len:(j + 1) * in_len])
            if rpad is not None:
                pieces.append(rpad)
        if len(pieces) == 1:
            o_ref[...] = pieces[0]
        else:
            o_ref[...] = jnp.concatenate(pieces, axis=-1)

    return kernel


def pad_pool(x, left: int = 0, right: int = 1, value=0):
    """Pallas equivalent of Pad_Pool.forward: ConstantPad1d((left, right), value)."""
    assert left >= 0 and right >= 0, "pad_pool only supports non-negative padding"

    N, C, L = x.shape
    L_out = L + left + right
    R = N * C

    itemsize = jnp.dtype(x.dtype).itemsize
    # Sublane granularity: 8 rows for 32-bit, 16 for 16-bit, 32 for 8-bit dtypes.
    sub = 8 * max(1, 4 // itemsize)

    # Lane-packing factor: pack k logical rows per physical row when L_out is
    # small, to fill the 128-lane vregs.  k must divide R (metadata-only reshape).
    k = 1
    kmax = max(1, 128 // max(L_out, 1))
    for cand in range(min(kmax, R), 1, -1):
        if R % cand == 0:
            k = cand
            break
    Rp = R // k
    W_in = k * L
    W_out = k * L_out

    x2 = x.reshape(Rp, W_in)

    # ---- VMEM accounting (lane-padded widths, double-buffered) ----
    try:
        vmem_cap = int(pltpu.get_tpu_info().vmem_capacity_bytes)
    except Exception:
        vmem_cap = 64 * 1024 * 1024  # conservative (v7x per-TC VMEM)
    # Explicit limit: ~48 MiB on v7x (64 MiB physical), 64 MiB on v5e/v6e.
    vmem_limit = min(vmem_cap * 3 // 4, 64 * 1024 * 1024)
    # Resident working set (in + out, double-buffered) cap: ~24 MiB.
    working_set_cap = min(vmem_limit // 2, 24 * 1024 * 1024)

    bytes_per_packed_row = (_round_up(W_in, 128) + _round_up(W_out, 128)) * itemsize
    rows_block = (working_set_cap // 2) // max(bytes_per_packed_row, 1)  # /2: double buffering
    rows_block = max(sub, (rows_block // sub) * sub)

    # Give both TensorCores work on v7x: force >= 2 grid steps when possible.
    if Rp >= 2 * sub:
        half = _round_up((Rp + 1) // 2, sub)
        rows_block = min(rows_block, half)
    if rows_block >= Rp:
        rows_block = Rp  # block equals full dim -> always layout-legal

    grid = (pl.cdiv(Rp, rows_block),)
    kernel = _make_pad_kernel(left, right, value, L, k)

    bytes_accessed = R * (L + L_out) * itemsize

    out2 = pl.pallas_call(
        kernel,
        out_shape=jax.ShapeDtypeStruct((Rp, W_out), x.dtype),
        grid=grid,
        # Last dims equal the full array dims; row dim is a multiple of the
        # dtype sublane count (or the full dim) -> satisfies (8,128) tiling.
        in_specs=[pl.BlockSpec((rows_block, W_in), lambda i: (i, 0))],
        out_specs=pl.BlockSpec((rows_block, W_out), lambda i: (i, 0)),
        compiler_params=pltpu.CompilerParams(
            dimension_semantics=("parallel",),  # shard rows across TCs on v7x
            vmem_limit_bytes=vmem_limit,
        ),
        cost_estimate=pl.CostEstimate(
            flops=0, transcendentals=0, bytes_accessed=bytes_accessed),
    )(x2)

    return out2.reshape(N, C, L_out)


if __name__ == "__main__":
    # Pad_Pool defaults: left=0, right=1, value=0; no learnable parameters.
    key = jax.random.PRNGKey(0)
    N, C, L = 2, 4, 16
    x = jax.random.normal(key, (N, C, L), dtype=jnp.float32)

    # Default configuration (the one the module actually uses).
    out = pad_pool(x, left=0, right=1, value=0)
    out = jax.block_until_ready(out)
    ref = jnp.pad(x, ((0, 0), (0, 0), (0, 1)), constant_values=0.0)
    assert out.shape == (N, C, L + 1), out.shape
    assert out.dtype == x.dtype
    assert jnp.allclose(out, ref), "mismatch vs reference padding (left=0, right=1)"

    # General (left > 0) path sanity check.
    out2 = pad_pool(x, left=2, right=3, value=0)
    out2 = jax.block_until_ready(out2)
    ref2 = jnp.pad(x, ((0, 0), (0, 0), (2, 3)), constant_values=0.0)
    assert out2.shape == (N, C, L + 5), out2.shape
    assert jnp.allclose(out2, ref2), "mismatch vs reference padding (left=2, right=3)"

    print("KERNEL_OK")
</pallas_src>

<mosaic_0001>
module attributes {stable_mosaic.version = 11 : i64} {
  func.func @kernel(%arg0: i32, %arg1: memref<2x64xf32, #tpu.memory_space<vmem>>, %arg2: memref<2x68xf32, #tpu.memory_space<vmem>>) attributes {dimension_semantics = [#tpu.dimension_semantics<parallel>], iteration_bounds = array<i64: 1>, scalar_prefetch = 0 : i64, scratch_operands = 0 : i64, tpu.core_type = #tpu.core_type<tc>, window_params = [{transform_indices = @transform_0, window_bounds = array<i64: 2, 64>}, {transform_indices = @transform_1, window_bounds = array<i64: 2, 68>}]} {
    %c0 = arith.constant 0 : index
    %c0_0 = arith.constant 0 : index
    %0 = vector.load %arg1[%c0, %c0_0] : memref<2x64xf32, #tpu.memory_space<vmem>>, vector<2x64xf32>
    %cst = arith.constant 0.000000e+00 : f32
    %1 = vector.broadcast %cst : f32 to vector<2x1xf32>
    %2 = vector.extract_strided_slice %0 {offsets = [0, 0], sizes = [2, 16], strides = [1, 1]} : vector<2x64xf32> to vector<2x16xf32>
    %3 = vector.extract_strided_slice %0 {offsets = [0, 16], sizes = [2, 16], strides = [1, 1]} : vector<2x64xf32> to vector<2x16xf32>
    %4 = vector.extract_strided_slice %0 {offsets = [0, 32], sizes = [2, 16], strides = [1, 1]} : vector<2x64xf32> to vector<2x16xf32>
    %5 = vector.extract_strided_slice %0 {offsets = [0, 48], sizes = [2, 16], strides = [1, 1]} : vector<2x64xf32> to vector<2x16xf32>
    %6 = tpu.concatenate %2, %1, %3, %1, %4, %1, %5, %1 in 1 : vector<2x16xf32>, vector<2x1xf32>, vector<2x16xf32>, vector<2x1xf32>, vector<2x16xf32>, vector<2x1xf32>, vector<2x16xf32>, vector<2x1xf32> -> vector<2x68xf32>
    %c0_1 = arith.constant 0 : index
    %c0_2 = arith.constant 0 : index
    %7 = vector.load %arg2[%c0_1, %c0_2] : memref<2x68xf32, #tpu.memory_space<vmem>>, vector<2x68xf32>
    tpu.vector_store %arg2[%c0_1, %c0_2], %6 {strides = array<i32>} : memref<2x68xf32, #tpu.memory_space<vmem>>, vector<2x68xf32>,
    return
  }
  func.func @transform_0(%arg0: i32) -> (i32, i32) {
    %c0_i32 = arith.constant 0 : i32
    %c0_i32_0 = arith.constant 0 : i32
    return %arg0, %c0_i32 : i32, i32
  }
  func.func @transform_1(%arg0: i32) -> (i32, i32) {
    %c0_i32 = arith.constant 0 : i32
    %c0_i32_0 = arith.constant 0 : i32
    return %arg0, %c0_i32 : i32, i32
  }
}

</mosaic_0001>

<llo_original>
// kernel: tpu_custom_call.1
$region0: #{tpu_custom_call.1}
  #allocation0 [shape = 'u32[]', space=smem, size = 0x4, offset = 0x4, fixed_abs, tag = 'smem constant byte address 0x4 - core index']
  #allocation1 [shape = 'u32[144,128]{1,0:T(1,128)}', space=vmem, size = 0x12000, scoped, tag = 'internal scratch']
  %s0 = inlined_call_operand.hbm [shape: f32[2,64], index: 0, kind: input, shape index: {}]
  %s1 = inlined_call_operand.hbm [shape: f32[2,68], index: 1, kind: output, shape index: {}]
  %s2 = sld [smem:[#allocation0]]
  $region18: #{tpu_custom_call.1} parent=0
    _
  %s4 = ssub.s32 1, %s2
  %s5 = scalar_select 0, %s4, %s2
  $region1: #{tpu_custom_call.1} parent=0
    #allocation2 [shape = 'u8[1024]{0}', space=vmem, size = 0x400, scoped, tag = 'input window, operand 0, single buffered']
    #allocation3 [shape = 's32[1]{0}', space=sflag, size = 0x4, scoped, tag = 'scoped memory for tpu_custom_call.1']
    #allocation4 [shape = 's32[1]{0}', space=sflag, size = 0x4, scoped, tag = 'scoped memory for tpu_custom_call.1']
    #allocation5 [shape = 'u8[1024]{0}', space=vmem, size = 0x400, scoped, tag = 'output window, operand 0, single buffered']
    %6 = vsyncpa [#allocation3], 0
    %7 = vsyncpa [#allocation4], 0
    // Predicated region
    $region2: #{tpu_custom_call.1} parent=1 // pred_check
      _
    $region3: #{tpu_custom_call.1} parent=1 // pred_check_branch
      %9 = sbr.rel (0) target = $region5
    $region4: #{tpu_custom_call.1} parent=1 // pred_region
      %s11 = ssub.s32 32, 32
      %12 = vsyncadd [#allocation3], %s11
      %s14 = sshll.u32 [#allocation2], 4
      %s15 = int_to_ptr.vmem [resolvable:$true] %s14
      %17 = dma.hbm_to_vmem [thread:$0]  %s0, 32, %s15, [#allocation3]
    $region5: #{tpu_custom_call.1} parent=1 // pred_fallthru
      _
    // Predicated region
    $region6: #{tpu_custom_call.1} parent=1 // pred_check
      _
    $region7: #{tpu_custom_call.1} parent=1 // pred_check_branch
      %19 = sbr.rel (0) target = $region9
    $region8: #{tpu_custom_call.1} parent=1 // pred_region
      %20 = dma.done [#allocation3], 32
    $region9: #{tpu_custom_call.1} parent=1 // pred_fallthru
      _
    %v21 = vld [vmem:[#allocation2] sm:$0x3]
    %23 = vrot.lane.b32.xlu0 %v21, 1
    %v24 = vpop.permute.xlu0 %23
    %26 = vrot.lane.b32.xlu0 %v21, 2
    %v27 = vpop.permute.xlu0 %26
    %29 = vrot.lane.b32.xlu0 %v21, 3
    %v30 = vpop.permute.xlu0 %29
    %vm32 = vcmask 130048
    %v33 = vsel %vm32, %v21, 0.0
    %vm34 = vcmask 138240
    %v35 = vsel %vm34, %v33, %v24
    %vm36 = vcmask 269312
    %v37 = vsel %vm36, %v35, 0.0
    %vm38 = vcmask 277504
    %v39 = vsel %vm38, %v37, %v27
    %vm40 = vcmask 408576
    %v41 = vsel %vm40, %v39, 0.0
    %vm42 = vcmask 416768
    %v43 = vsel %vm42, %v41, %v30
    %vm44 = vcmask 547840
    %v45 = vsel %vm44, %v43, 0.0
    %vm46 = vcmask 549888
    %47 = vst.msk [vmem:[#allocation5] sm:$0x3] %vm46, %v45
    // Predicated region
    $region10: #{tpu_custom_call.1} parent=1 // pred_check
      _
    $region11: #{tpu_custom_call.1} parent=1 // pred_check_branch
      %49 = sbr.rel (0) target = $region13
    $region12: #{tpu_custom_call.1} parent=1 // pred_region
      %s51 = ssub.s32 32, 32
      %52 = vsyncadd [#allocation4], %s51
      %s54 = sshll.u32 [#allocation5], 4
      %s55 = int_to_ptr.vmem [resolvable:$true] %s54
      %57 = dma.vmem_to_hbm [thread:$0]  %s55, 32, %s1, [#allocation4]
    $region13: #{tpu_custom_call.1} parent=1 // pred_fallthru
      _
    // Predicated region
    $region14: #{tpu_custom_call.1} parent=1 // pred_check
      _
    $region15: #{tpu_custom_call.1} parent=1 // pred_check_branch
      %59 = sbr.rel (0) target = $region17
    $region16: #{tpu_custom_call.1} parent=1 // pred_region
      %60 = dma.done [#allocation4], 32
    $region17: #{tpu_custom_call.1} parent=1 // pred_fallthru
      _
    %61 = vsyncpa [#allocation3], 1
    %62 = vsyncpa [#allocation4], 1

</llo_original>
